<compile_context>
chip_gen: v5e
topology: v5e:2x2
jax: 0.10.0
libtpu: 0.0.40
codegen_flags: <defaults>
</compile_context>

<pallas_src>
import jax
import jax.numpy as jnp
from jax.experimental import pallas as pl
from jax.experimental.pallas import tpu as pltpu


def _round_up(x, m):
    return ((x + m - 1) // m) * m


def _round_down(x, m):
    return (x // m) * m


def _sampler_kernel(dirs_ref, zsel_ref, orow_ref, pts_ref):
    # dirs_ref: VMEM (TN, 3)    f32  -- ray directions tile
    # zsel_ref: VMEM (3, 3*P)   f32  -- zsel[c, 3*p + c2] = z[p] * (c == c2)
    # orow_ref: VMEM (1, 3*P)   f32  -- orow[0, 3*p + c]  = origins[0, c]
    # pts_ref : VMEM (TN, 3*P)  f32  -- pts[n, 3*p + c]   = dirs[n, c]*z[p] + origins[0, c]
    d = dirs_ref[...]           # (TN, 3), loaded once
    zs = zsel_ref[...]          # (3, 3*P), loaded once
    pts_ref[...] = (
        d[:, 0:1] * zs[0:1, :]
        + d[:, 1:2] * zs[1:2, :]
        + d[:, 2:3] * zs[2:3, :]
        + orow_ref[...]
    )


def _tpu_vmem_info():
    """Returns (vmem_capacity_bytes, assume_multi_tensorcore)."""
    try:
        info = pltpu.get_tpu_info()
        vmem = int(getattr(info, "vmem_capacity_bytes", 64 << 20))
        # v7x reports 64 MiB per TensorCore and has 2 TCs/chip; v5e/v6e report 128 MiB, 1 TC.
        return vmem, vmem <= (64 << 20)
    except Exception:
        # Conservative VMEM default; do not assume megacore if the query failed.
        return 64 << 20, False


def _choose_ray_tile(n, lanes, vmem_bytes, multi_tc):
    """Sublane-aligned ray tile from a VMEM-capacity-derived output-block budget."""
    # ~1/5 of VMEM per output block: double-buffered output ~2/5, inputs are tiny,
    # plenty of headroom even on v7x's 64 MiB.
    out_block_budget = max(4 << 20, vmem_bytes // 5)
    tn = max(8, _round_down(out_block_budget // (lanes * 4), 8))
    tn = min(tn, _round_up(n, 8))
    if multi_tc and n >= 16:
        # Two TensorCores: make the "parallel" grid-step count even so both cores get the
        # same number of tiles (avoid a 2:1 split tail). Single-TC parts skip this (the
        # grid is a serial loop there; largest tile wins).
        steps = pl.cdiv(n, tn)
        if steps % 2 == 1:
            target = max(2, steps + 1)
            cand = max(8, _round_up(pl.cdiv(n, target), 8))
            if pl.cdiv(n, cand) % 2 == 0:
                tn = cand
    return tn


def stratified_raysampler(directions, origins, *, n_pts_per_ray, min_depth, max_depth,
                          ray_tile=None, force_pallas=False,
                          xla_fast_path_bytes=256 << 10):
    """directions: (N, 3), origins: (M, 3) (only origins[0] is used, as in the module).

    Returns (sample_points (N, P, 3) f32, sample_lengths (N, P, 1) f32)."""
    n = int(directions.shape[0])
    p = int(n_pts_per_ray)
    assert directions.shape[-1] == 3 and origins.shape[-1] == 3

    dirs_f32 = directions.astype(jnp.float32)
    origin0 = origins[0].astype(jnp.float32)

    # z_vals exactly as torch.linspace (endpoint included).
    z = jnp.linspace(float(min_depth), float(max_depth), p, dtype=jnp.float32)   # (P,)
    # sample_lengths is a pure broadcast of z -- emitted outside the kernel (25% fewer
    # kernel HBM writes); values identical to z_vals * ones_like(points[..., :1]).
    sample_lengths = jnp.broadcast_to(z[None, :, None], (n, p, 1))

    out_bytes = n * p * 3 * 4
    if (not force_pallas) and out_bytes < xla_fast_path_bytes:
        # Tiny-bundle fast path: fixed pallas_call/grid setup would dominate; a fused XLA
        # broadcast is strictly faster and avoids all tiling machinery.
        pts = dirs_f32[:, None, :] * z[None, :, None] + origin0[None, None, :]
        return pts, sample_lengths

    lanes = 3 * p                       # output last dim == full array extent (always legal)
    vmem_bytes, multi_tc = _tpu_vmem_info()
    if ray_tile is not None:
        tn = int(ray_tile)
        assert tn % 8 == 0, "ray tile must be sublane (8) aligned"
    else:
        tn = _choose_ray_tile(n, lanes, vmem_bytes, multi_tc)

    grid = (pl.cdiv(n, tn),)            # ragged boundary block: Pallas clips the writeback

    # Tiny constant tables that encode the (p, c) lane interleave.
    eye3 = jnp.eye(3, dtype=jnp.float32)
    zsel = (eye3[:, None, :] * z[None, :, None]).reshape(3, lanes)   # (3, 3*P)
    orow = jnp.tile(origin0[None, :], (1, p))                        # (1, 3*P)

    # Explicit VMEM limit from the actual (double-buffered) buffer sum, with headroom.
    buf_bytes = 2 * (tn * lanes + tn * 3 + 3 * lanes + lanes) * 4
    vmem_limit = int(min(vmem_bytes, max(32 << 20, int(buf_bytes * 1.3) + (1 << 20))))

    cost = pl.CostEstimate(
        flops=6 * n * lanes,
        transcendentals=0,
        bytes_accessed=4 * (n * lanes + n * 3 + 3 * lanes + lanes),
    )

    pts_flat = pl.pallas_call(
        _sampler_kernel,
        out_shape=jax.ShapeDtypeStruct((n, lanes), jnp.float32),
        grid_spec=pltpu.PrefetchScalarGridSpec(
            num_scalar_prefetch=0,
            grid=grid,
            in_specs=[
                pl.BlockSpec((tn, 3), lambda i: (i, 0)),       # directions tile
                pl.BlockSpec((3, lanes), lambda i: (0, 0)),    # z-select table (invariant)
                pl.BlockSpec((1, lanes), lambda i: (0, 0)),    # origin row (invariant)
            ],
            out_specs=pl.BlockSpec((tn, lanes), lambda i: (i, 0)),
        ),
        compiler_params=pltpu.CompilerParams(
            dimension_semantics=("parallel",),
            vmem_limit_bytes=vmem_limit,
        ),
        cost_estimate=cost,
    )(dirs_f32, zsel, orow)

    # Free reshape: the layout is already (N, P, 3)-interleaved; no slicing, no copy.
    sample_points = pts_flat.reshape(n, p, 3)
    return sample_points, sample_lengths


if __name__ == "__main__":
    # Small, deterministic ray bundle. No learned parameters in this module
    # (cfg only supplies n_pts_per_ray / min_depth / max_depth).
    N_RAYS = 300            # deliberately NOT a multiple of the tile -> exercises boundary clipping
    N_PTS_PER_RAY = 128     # 3*P = 384 -> lane-dense (unmasked) output stores
    MIN_DEPTH = 0.1
    MAX_DEPTH = 4.0

    key = jax.random.PRNGKey(0)
    k_dir, k_org = jax.random.split(key)
    directions = jax.random.normal(k_dir, (N_RAYS, 3), dtype=jnp.float32)
    directions = directions / jnp.linalg.norm(directions, axis=-1, keepdims=True)
    origins = jax.random.normal(k_org, (N_RAYS, 3), dtype=jnp.float32)

    # Pure-JAX reference (mirrors the PyTorch forward exactly: only origins[0] is used).
    z_ref = jnp.linspace(MIN_DEPTH, MAX_DEPTH, N_PTS_PER_RAY, dtype=jnp.float32)
    ref_pts = directions[:, None, :] * z_ref[None, :, None] + origins[0][None, None, :]
    ref_len = jnp.broadcast_to(z_ref[None, :, None], (N_RAYS, N_PTS_PER_RAY, 1))

    # 1) Pallas path with auto tile (single ragged block, clipped writeback).
    sample_points, sample_lengths = stratified_raysampler(
        directions, origins, n_pts_per_ray=N_PTS_PER_RAY,
        min_depth=MIN_DEPTH, max_depth=MAX_DEPTH, force_pallas=True)
    jax.block_until_ready((sample_points, sample_lengths))
    assert sample_points.shape == (N_RAYS, N_PTS_PER_RAY, 3)
    assert sample_lengths.shape == (N_RAYS, N_PTS_PER_RAY, 1)
    assert jnp.allclose(sample_points, ref_pts, rtol=1e-6, atol=1e-6)
    assert jnp.allclose(sample_lengths, ref_len, rtol=1e-6, atol=1e-6)

    # 2) Pallas path with a small explicit tile -> multi-step grid + clipped boundary block.
    pts_tiled, _ = stratified_raysampler(
        directions, origins, n_pts_per_ray=N_PTS_PER_RAY,
        min_depth=MIN_DEPTH, max_depth=MAX_DEPTH, force_pallas=True, ray_tile=128)
    jax.block_until_ready(pts_tiled)
    assert jnp.allclose(pts_tiled, ref_pts, rtol=1e-6, atol=1e-6)

    # 3) Default entry point at tiny size -> XLA fast path (no pallas_call).
    pts_small, lens_small = stratified_raysampler(
        directions[:16], origins[:16], n_pts_per_ray=N_PTS_PER_RAY,
        min_depth=MIN_DEPTH, max_depth=MAX_DEPTH)
    jax.block_until_ready((pts_small, lens_small))
    assert jnp.allclose(pts_small, ref_pts[:16], rtol=1e-6, atol=1e-6)
    assert jnp.allclose(lens_small, ref_len[:16], rtol=1e-6, atol=1e-6)

    print("KERNEL_OK")
</pallas_src>

<mosaic_0001>
module attributes {stable_mosaic.version = 11 : i64} {
  func.func @_sampler_kernel(%arg0: i32, %arg1: memref<304x3xf32, #tpu.memory_space<vmem>>, %arg2: memref<3x384xf32, #tpu.memory_space<vmem>>, %arg3: memref<1x384xf32, #tpu.memory_space<vmem>>, %arg4: memref<304x384xf32, #tpu.memory_space<vmem>>) attributes {dimension_semantics = [#tpu.dimension_semantics<parallel>], iteration_bounds = array<i64: 1>, scalar_prefetch = 0 : i64, scratch_operands = 0 : i64, tpu.core_type = #tpu.core_type<tc>, window_params = [{transform_indices = @transform_0, window_bounds = array<i64: 304, 3>}, {pipeline_mode = #tpu.pipeline_mode<synchronous>, transform_indices = @transform_1, window_bounds = array<i64: 3, 384>}, {pipeline_mode = #tpu.pipeline_mode<synchronous>, transform_indices = @transform_2, window_bounds = array<i64: 1, 384>}, {transform_indices = @transform_3, window_bounds = array<i64: 304, 384>}]} {
    %c0 = arith.constant 0 : index
    %c0_0 = arith.constant 0 : index
    %0 = vector.load %arg1[%c0, %c0_0] : memref<304x3xf32, #tpu.memory_space<vmem>>, vector<304x3xf32>
    %c0_1 = arith.constant 0 : index
    %c0_2 = arith.constant 0 : index
    %1 = vector.load %arg2[%c0_1, %c0_2] : memref<3x384xf32, #tpu.memory_space<vmem>>, vector<3x384xf32>
    %2 = vector.extract_strided_slice %0 {offsets = [0, 0], sizes = [304, 1], strides = [1, 1]} : vector<304x3xf32> to vector<304x1xf32>
    %3 = vector.extract_strided_slice %1 {offsets = [0, 0], sizes = [1, 384], strides = [1, 1]} : vector<3x384xf32> to vector<1x384xf32>
    %4 = vector.broadcast %2 : vector<304x1xf32> to vector<304x384xf32>
    %5 = vector.broadcast %3 : vector<1x384xf32> to vector<304x384xf32>
    %6 = arith.mulf %4, %5 : vector<304x384xf32>
    %7 = vector.extract_strided_slice %0 {offsets = [0, 1], sizes = [304, 1], strides = [1, 1]} : vector<304x3xf32> to vector<304x1xf32>
    %8 = vector.extract_strided_slice %1 {offsets = [1, 0], sizes = [1, 384], strides = [1, 1]} : vector<3x384xf32> to vector<1x384xf32>
    %9 = vector.broadcast %7 : vector<304x1xf32> to vector<304x384xf32>
    %10 = vector.broadcast %8 : vector<1x384xf32> to vector<304x384xf32>
    %11 = arith.mulf %9, %10 : vector<304x384xf32>
    %12 = arith.addf %6, %11 : vector<304x384xf32>
    %13 = vector.extract_strided_slice %0 {offsets = [0, 2], sizes = [304, 1], strides = [1, 1]} : vector<304x3xf32> to vector<304x1xf32>
    %14 = vector.extract_strided_slice %1 {offsets = [2, 0], sizes = [1, 384], strides = [1, 1]} : vector<3x384xf32> to vector<1x384xf32>
    %15 = vector.broadcast %13 : vector<304x1xf32> to vector<304x384xf32>
    %16 = vector.broadcast %14 : vector<1x384xf32> to vector<304x384xf32>
    %17 = arith.mulf %15, %16 : vector<304x384xf32>
    %18 = arith.addf %12, %17 : vector<304x384xf32>
    %c0_3 = arith.constant 0 : index
    %c0_4 = arith.constant 0 : index
    %19 = vector.load %arg3[%c0_3, %c0_4] : memref<1x384xf32, #tpu.memory_space<vmem>>, vector<1x384xf32>
    %20 = vector.broadcast %19 : vector<1x384xf32> to vector<304x384xf32>
    %21 = arith.addf %18, %20 : vector<304x384xf32>
    %c0_5 = arith.constant 0 : index
    %c0_6 = arith.constant 0 : index
    %22 = vector.load %arg4[%c0_5, %c0_6] : memref<304x384xf32, #tpu.memory_space<vmem>>, vector<304x384xf32>
    tpu.vector_store %arg4[%c0_5, %c0_6], %21 {strides = array<i32>} : memref<304x384xf32, #tpu.memory_space<vmem>>, vector<304x384xf32>,
    return
  }
  func.func @transform_0(%arg0: i32) -> (i32, i32) {
    %c0_i32 = arith.constant 0 : i32
    %c0_i32_0 = arith.constant 0 : i32
    return %arg0, %c0_i32 : i32, i32
  }
  func.func @transform_1(%arg0: i32) -> (i32, i32) {
    %c0_i32 = arith.constant 0 : i32
    %c0_i32_0 = arith.constant 0 : i32
    %c0_i32_1 = arith.constant 0 : i32
    return %c0_i32, %c0_i32_0 : i32, i32
  }
  func.func @transform_2(%arg0: i32) -> (i32, i32) {
    %c0_i32 = arith.constant 0 : i32
    %c0_i32_0 = arith.constant 0 : i32
    %c0_i32_1 = arith.constant 0 : i32
    return %c0_i32, %c0_i32_0 : i32, i32
  }
  func.func @transform_3(%arg0: i32) -> (i32, i32) {
    %c0_i32 = arith.constant 0 : i32
    %c0_i32_0 = arith.constant 0 : i32
    return %arg0, %c0_i32 : i32, i32
  }
}

</mosaic_0001>

<llo_original>
// kernel: tpu_custom_call.1
$region0: #{tpu_custom_call.1}
  #allocation0 [shape = 'u32[]', space=smem, size = 0x4, offset = 0x4, fixed_abs, tag = 'smem constant byte address 0x4 - core index']
  #allocation1 [shape = 'u32[72,128]{1,0:T(1,128)}', space=vmem, size = 0x9000, scoped, tag = 'internal scratch']
  %s0 = inlined_call_operand.vmem [shape: f32[300,3], index: 0, kind: input, shape index: {}]
  %s1 = inlined_call_operand.vmem [shape: f32[3,384], index: 1, kind: input, shape index: {}]
  %s2 = inlined_call_operand.vmem [shape: f32[1,384], index: 2, kind: input, shape index: {}]
  %s3 = inlined_call_operand.hbm [shape: f32[300,384], index: 3, kind: output, shape index: {}]
  %s4 = sld [smem:[#allocation0]]
  $region22: #{tpu_custom_call.1} parent=0
    _
  %s6 = ssub.s32 1, %s4
  %s7 = scalar_select 0, %s6, %s4
  $region1: #{tpu_custom_call.1} parent=0
    #allocation2 [shape = 'u8[466944]{0}', space=vmem, size = 0x72000, scoped, tag = 'output window, operand 0, single buffered']
    #allocation3 [shape = 's32[1]{0}', space=sflag, size = 0x4, scoped, tag = 'scoped memory for tpu_custom_call.1']
    %8 = vsyncpa [#allocation3], 0
    // Predicated region
    $region2: #{tpu_custom_call.1} parent=1 // pred_check
      _
    $region3: #{tpu_custom_call.1} parent=1 // pred_check_branch
      %10 = sbr.rel (0) target = $region5
    $region4: #{tpu_custom_call.1} parent=1 // pred_region
      _
    $region5: #{tpu_custom_call.1} parent=1 // pred_fallthru
      _
    // Predicated region
    $region6: #{tpu_custom_call.1} parent=1 // pred_check
      _
    $region7: #{tpu_custom_call.1} parent=1 // pred_check_branch
      %12 = sbr.rel (0) target = $region9
    $region8: #{tpu_custom_call.1} parent=1 // pred_region
      _
    $region9: #{tpu_custom_call.1} parent=1 // pred_fallthru
      _
    // Predicated region
    $region10: #{tpu_custom_call.1} parent=1 // pred_check
      _
    $region11: #{tpu_custom_call.1} parent=1 // pred_check_branch
      %14 = sbr.rel (0) target = $region13
    $region12: #{tpu_custom_call.1} parent=1 // pred_region
      _
    $region13: #{tpu_custom_call.1} parent=1 // pred_fallthru
      _
    %v15 = vld [vmem:[%s0] sm:$0xff]
    %v16 = vld [vmem:[%s0 + $0x8] sm:$0xff]
    %v17 = vld [vmem:[%s0 + $0x10] sm:$0xff]
    %v18 = vld [vmem:[%s0 + $0x18] sm:$0xff]
    %v19 = vld [vmem:[%s0 + $0x20] sm:$0xff]
    %v20 = vld [vmem:[%s0 + $0x28] sm:$0xff]
    %v21 = vld [vmem:[%s0 + $0x30] sm:$0xff]
    %v22 = vld [vmem:[%s0 + $0x38] sm:$0xff]
    %v23 = vld [vmem:[%s0 + $0x40] sm:$0xff]
    %v24 = vld [vmem:[%s0 + $0x48] sm:$0xff]
    %v25 = vld [vmem:[%s0 + $0x50] sm:$0xff]
    %v26 = vld [vmem:[%s0 + $0x58] sm:$0xff]
    %v27 = vld [vmem:[%s0 + $0x60] sm:$0xff]
    %v28 = vld [vmem:[%s0 + $0x68] sm:$0xff]
    %v29 = vld [vmem:[%s0 + $0x70] sm:$0xff]
    %v30 = vld [vmem:[%s0 + $0x78] sm:$0xff]
    %v31 = vld [vmem:[%s0 + $0x80] sm:$0xff]
    %v32 = vld [vmem:[%s0 + $0x88] sm:$0xff]
    %v33 = vld [vmem:[%s0 + $0x90] sm:$0xff]
    %v34 = vld [vmem:[%s0 + $0x98] sm:$0xff]
    %v35 = vld [vmem:[%s0 + $0xa0] sm:$0xff]
    %v36 = vld [vmem:[%s0 + $0xa8] sm:$0xff]
    %v37 = vld [vmem:[%s0 + $0xb0] sm:$0xff]
    %v38 = vld [vmem:[%s0 + $0xb8] sm:$0xff]
    %v39 = vld [vmem:[%s0 + $0xc0] sm:$0xff]
    %v40 = vld [vmem:[%s0 + $0xc8] sm:$0xff]
    %v41 = vld [vmem:[%s0 + $0xd0] sm:$0xff]
    %v42 = vld [vmem:[%s0 + $0xd8] sm:$0xff]
    %v43 = vld [vmem:[%s0 + $0xe0] sm:$0xff]
    %v44 = vld [vmem:[%s0 + $0xe8] sm:$0xff]
    %v45 = vld [vmem:[%s0 + $0xf0] sm:$0xff]
    %v46 = vld [vmem:[%s0 + $0xf8] sm:$0xff]
    %v47 = vld [vmem:[%s0 + $0x100] sm:$0xff]
    %v48 = vld [vmem:[%s0 + $0x108] sm:$0xff]
    %v49 = vld [vmem:[%s0 + $0x110] sm:$0xff]
    %v50 = vld [vmem:[%s0 + $0x118] sm:$0xff]
    %v51 = vld [vmem:[%s0 + $0x120] sm:$0xff]
    %v52 = vld [vmem:[%s0 + $0x128] sm:$0xff]
    %v53 = vld [vmem:[%s1] sm:$0x77]
    %v54 = vld [vmem:[%s1 + $0x8] sm:$0x7]
    %56 = vset.pattern.permute.xlu0 0
    %57 = vperm.xlu0 %56, %v15
    %v58 = vpop.permute.xlu0 %57
    %61 = vset.pattern.permute.xlu0 0
    %62 = vperm.xlu0 %61, %v16
    %v63 = vpop.permute.xlu0 %62
    %66 = vset.pattern.permute.xlu0 0
    %67 = vperm.xlu0 %66, %v17
    %v68 = vpop.permute.xlu0 %67
    %71 = vset.pattern.permute.xlu0 0
    %72 = vperm.xlu0 %71, %v18
    %v73 = vpop.permute.xlu0 %72
    %76 = vset.pattern.permute.xlu0 0
    %77 = vperm.xlu0 %76, %v19
    %v78 = vpop.permute.xlu0 %77
    %81 = vset.pattern.permute.xlu0 0
    %82 = vperm.xlu0 %81, %v20
    %v83 = vpop.permute.xlu0 %82
    %86 = vset.pattern.permute.xlu0 0
    %87 = vperm.xlu0 %86, %v21
    %v88 = vpop.permute.xlu0 %87
    %91 = vset.pattern.permute.xlu0 0
    %92 = vperm.xlu0 %91, %v22
    %v93 = vpop.permute.xlu0 %92
    %96 = vset.pattern.permute.xlu0 0
    %97 = vperm.xlu0 %96, %v23
    %v98 = vpop.permute.xlu0 %97
    %101 = vset.pattern.permute.xlu0 0
    %102 = vperm.xlu0 %101, %v24
    %v103 = vpop.permute.xlu0 %102
    %106 = vset.pattern.permute.xlu0 0
    %107 = vperm.xlu0 %106, %v25
    %v108 = vpop.permute.xlu0 %107
    %111 = vset.pattern.permute.xlu0 0
    %112 = vperm.xlu0 %111, %v26
    %v113 = vpop.permute.xlu0 %112
    %116 = vset.pattern.permute.xlu0 0
    %117 = vperm.xlu0 %116, %v27
    %v118 = vpop.permute.xlu0 %117
    %121 = vset.pattern.permute.xlu0 0
    %122 = vperm.xlu0 %121, %v28
    %v123 = vpop.permute.xlu0 %122
    %126 = vset.pattern.permute.xlu0 0
    %127 = vperm.xlu0 %126, %v29
    %v128 = vpop.permute.xlu0 %127
    %131 = vset.pattern.permute.xlu0 0
    %132 = vperm.xlu0 %131, %v30
    %v133 = vpop.permute.xlu0 %132
    %136 = vset.pattern.permute.xlu0 0
    %137 = vperm.xlu0 %136, %v31
    %v138 = vpop.permute.xlu0 %137
    %141 = vset.pattern.permute.xlu0 0
    %142 = vperm.xlu0 %141, %v32
    %v143 = vpop.permute.xlu0 %142
    %146 = vset.pattern.permute.xlu0 0
    %147 = vperm.xlu0 %146, %v33
    %v148 = vpop.permute.xlu0 %147
    %151 = vset.pattern.permute.xlu0 0
    %152 = vperm.xlu0 %151, %v34
    %v153 = vpop.permute.xlu0 %152
    %156 = vset.pattern.permute.xlu0 0
    %157 = vperm.xlu0 %156, %v35
    %v158 = vpop.permute.xlu0 %157
    %161 = vset.pattern.permute.xlu0 0
    %162 = vperm.xlu0 %161, %v36
    %v163 = vpop.permute.xlu0 %162
    %166 = vset.pattern.permute.xlu0 0
    %167 = vperm.xlu0 %166, %v37
    %v168 = vpop.permute.xlu0 %167
    %171 = vset.pattern.permute.xlu0 0
    %172 = vperm.xlu0 %171, %v38
    %v173 = vpop.permute.xlu0 %172
    %176 = vset.pattern.permute.xlu0 0
    %177 = vperm.xlu0 %176, %v39
    %v178 = vpop.permute.xlu0 %177
    %181 = vset.pattern.permute.xlu0 0
    %182 = vperm.xlu0 %181, %v40
    %v183 = vpop.permute.xlu0 %182
    %186 = vset.pattern.permute.xlu0 0
    %187 = vperm.xlu0 %186, %v41
    %v188 = vpop.permute.xlu0 %187
    %191 = vset.pattern.permute.xlu0 0
    %192 = vperm.xlu0 %191, %v42
    %v193 = vpop.permute.xlu0 %192
    %196 = vset.pattern.permute.xlu0 0
    %197 = vperm.xlu0 %196, %v43
    %v198 = vpop.permute.xlu0 %197
    %201 = vset.pattern.permute.xlu0 0
    %202 = vperm.xlu0 %201, %v44
    %v203 = vpop.permute.xlu0 %202
    %206 = vset.pattern.permute.xlu0 0
    %207 = vperm.xlu0 %206, %v45
    %v208 = vpop.permute.xlu0 %207
    %211 = vset.pattern.permute.xlu0 0
    %212 = vperm.xlu0 %211, %v46
    %v213 = vpop.permute.xlu0 %212
    %216 = vset.pattern.permute.xlu0 0
    %217 = vperm.xlu0 %216, %v47
    %v218 = vpop.permute.xlu0 %217
    %221 = vset.pattern.permute.xlu0 0
    %222 = vperm.xlu0 %221, %v48
    %v223 = vpop.permute.xlu0 %222
    %226 = vset.pattern.permute.xlu0 0
    %227 = vperm.xlu0 %226, %v49
    %v228 = vpop.permute.xlu0 %227
    %231 = vset.pattern.permute.xlu0 0
    %232 = vperm.xlu0 %231, %v50
    %v233 = vpop.permute.xlu0 %232
    %236 = vset.pattern.permute.xlu0 0
    %237 = vperm.xlu0 %236, %v51
    %v238 = vpop.permute.xlu0 %237
    %241 = vset.pattern.permute.xlu0 0
    %242 = vperm.xlu0 %241, %v52
    %v243 = vpop.permute.xlu0 %242
    %v247 = vperm.slane %v53, 0
    %v248 = vperm.slane %v53, 4
    %v249 = vperm.slane %v54, 0
    %v253 = vperm.slane %v247, 0
    %v254 = vperm.slane %v248, 0
    %v255 = vperm.slane %v249, 0
    %v256 = vmul.f32 %v58, %v253
    %v257 = vmul.f32 %v58, %v254
    %v258 = vmul.f32 %v58, %v255
    %v259 = vmul.f32 %v63, %v253
    %v260 = vmul.f32 %v63, %v254
    %v261 = vmul.f32 %v63, %v255
    %v262 = vmul.f32 %v68, %v253
    %v263 = vmul.f32 %v68, %v254
    %v264 = vmul.f32 %v68, %v255
    %v265 = vmul.f32 %v73, %v253
    %v266 = vmul.f32 %v73, %v254
    %v267 = vmul.f32 %v73, %v255
    %v268 = vmul.f32 %v78, %v253
    %v269 = vmul.f32 %v78, %v254
    %v270 = vmul.f32 %v78, %v255
    %v271 = vmul.f32 %v83, %v253
    %v272 = vmul.f32 %v83, %v254
    %v273 = vmul.f32 %v83, %v255
    %v274 = vmul.f32 %v88, %v253
    %v275 = vmul.f32 %v88, %v254
    %v276 = vmul.f32 %v88, %v255
    %v277 = vmul.f32 %v93, %v253
    %v278 = vmul.f32 %v93, %v254
    %v279 = vmul.f32 %v93, %v255
    %v280 = vmul.f32 %v98, %v253
    %v281 = vmul.f32 %v98, %v254
    %v282 = vmul.f32 %v98, %v255
    %v283 = vmul.f32 %v103, %v253
    %v284 = vmul.f32 %v103, %v254
    %v285 = vmul.f32 %v103, %v255
    %v286 = vmul.f32 %v108, %v253
    %v287 = vmul.f32 %v108, %v254
    %v288 = vmul.f32 %v108, %v255
    %v289 = vmul.f32 %v113, %v253
    %v290 = vmul.f32 %v113, %v254
    %v291 = vmul.f32 %v113, %v255
    %v292 = vmul.f32 %v118, %v253
    %v293 = vmul.f32 %v118, %v254
    %v294 = vmul.f32 %v118, %v255
    %v295 = vmul.f32 %v123, %v253
    %v296 = vmul.f32 %v123, %v254
    %v297 = vmul.f32 %v123, %v255
    %v298 = vmul.f32 %v128, %v253
    %v299 = vmul.f32 %v128, %v254
    %v300 = vmul.f32 %v128, %v255
    %v301 = vmul.f32 %v133, %v253
    %v302 = vmul.f32 %v133, %v254
    %v303 = vmul.f32 %v133, %v255
    %v304 = vmul.f32 %v138, %v253
    %v305 = vmul.f32 %v138, %v254
    %v306 = vmul.f32 %v138, %v255
    %v307 = vmul.f32 %v143, %v253
    %v308 = vmul.f32 %v143, %v254
    %v309 = vmul.f32 %v143, %v255
    %v310 = vmul.f32 %v148, %v253
    %v311 = vmul.f32 %v148, %v254
    %v312 = vmul.f32 %v148, %v255
    %v313 = vmul.f32 %v153, %v253
    %v314 = vmul.f32 %v153, %v254
    %v315 = vmul.f32 %v153, %v255
    %v316 = vmul.f32 %v158, %v253
    %v317 = vmul.f32 %v158, %v254
    %v318 = vmul.f32 %v158, %v255
    %v319 = vmul.f32 %v163, %v253
    %v320 = vmul.f32 %v163, %v254
    %v321 = vmul.f32 %v163, %v255
    %v322 = vmul.f32 %v168, %v253
    %v323 = vmul.f32 %v168, %v254
    %v324 = vmul.f32 %v168, %v255
    %v325 = vmul.f32 %v173, %v253
    %v326 = vmul.f32 %v173, %v254
    %v327 = vmul.f32 %v173, %v255
    %v328 = vmul.f32 %v178, %v253
    %v329 = vmul.f32 %v178, %v254
    %v330 = vmul.f32 %v178, %v255
    %v331 = vmul.f32 %v183, %v253
    %v332 = vmul.f32 %v183, %v254
    %v333 = vmul.f32 %v183, %v255
    %v334 = vmul.f32 %v188, %v253
    %v335 = vmul.f32 %v188, %v254
    %v336 = vmul.f32 %v188, %v255
    %v337 = vmul.f32 %v193, %v253
    %v338 = vmul.f32 %v193, %v254
    %v339 = vmul.f32 %v193, %v255
    %v340 = vmul.f32 %v198, %v253
    %v341 = vmul.f32 %v198, %v254
    %v342 = vmul.f32 %v198, %v255
    %v343 = vmul.f32 %v203, %v253
    %v344 = vmul.f32 %v203, %v254
    %v345 = vmul.f32 %v203, %v255
    %v346 = vmul.f32 %v208, %v253
    %v347 = vmul.f32 %v208, %v254
    %v348 = vmul.f32 %v208, %v255
    %v349 = vmul.f32 %v213, %v253
    %v350 = vmul.f32 %v213, %v254
    %v351 = vmul.f32 %v213, %v255
    %v352 = vmul.f32 %v218, %v253
    %v353 = vmul.f32 %v218, %v254
    %v354 = vmul.f32 %v218, %v255
    %v355 = vmul.f32 %v223, %v253
    %v356 = vmul.f32 %v223, %v254
    %v357 = vmul.f32 %v223, %v255
    %v358 = vmul.f32 %v228, %v253
    %v359 = vmul.f32 %v228, %v254
    %v360 = vmul.f32 %v228, %v255
    %v361 = vmul.f32 %v233, %v253
    %v362 = vmul.f32 %v233, %v254
    %v363 = vmul.f32 %v233, %v255
    %v364 = vmul.f32 %v238, %v253
    %v365 = vmul.f32 %v238, %v254
    %v366 = vmul.f32 %v238, %v255
    %v367 = vmul.f32 %v243, %v253
    %v368 = vmul.f32 %v243, %v254
    %v369 = vmul.f32 %v243, %v255
    %370 = vset.pattern.permute.xlu0 1
    %371 = vperm.xlu0 %370, %v15
    %v372 = vpop.permute.xlu0 %371
    %374 = vset.pattern.permute.xlu0 1
    %375 = vperm.xlu0 %374, %v16
    %v376 = vpop.permute.xlu0 %375
    %378 = vset.pattern.permute.xlu0 1
    %379 = vperm.xlu0 %378, %v17
    %v380 = vpop.permute.xlu0 %379
    %382 = vset.pattern.permute.xlu0 1
    %383 = vperm.xlu0 %382, %v18
    %v384 = vpop.permute.xlu0 %383
    %386 = vset.pattern.permute.xlu0 1
    %387 = vperm.xlu0 %386, %v19
    %v388 = vpop.permute.xlu0 %387
    %390 = vset.pattern.permute.xlu0 1
    %391 = vperm.xlu0 %390, %v20
    %v392 = vpop.permute.xlu0 %391
    %394 = vset.pattern.permute.xlu0 1
    %395 = vperm.xlu0 %394, %v21
    %v396 = vpop.permute.xlu0 %395
    %398 = vset.pattern.permute.xlu0 1
    %399 = vperm.xlu0 %398, %v22
    %v400 = vpop.permute.xlu0 %399
    %402 = vset.pattern.permute.xlu0 1
    %403 = vperm.xlu0 %402, %v23
    %v404 = vpop.permute.xlu0 %403
    %406 = vset.pattern.permute.xlu0 1
    %407 = vperm.xlu0 %406, %v24
    %v408 = vpop.permute.xlu0 %407
    %410 = vset.pattern.permute.xlu0 1
    %411 = vperm.xlu0 %410, %v25
    %v412 = vpop.permute.xlu0 %411
    %414 = vset.pattern.permute.xlu0 1
    %415 = vperm.xlu0 %414, %v26
    %v416 = vpop.permute.xlu0 %415
    %418 = vset.pattern.permute.xlu0 1
    %419 = vperm.xlu0 %418, %v27
    %v420 = vpop.permute.xlu0 %419
    %422 = vset.pattern.permute.xlu0 1
    %423 = vperm.xlu0 %422, %v28
    %v424 = vpop.permute.xlu0 %423
    %426 = vset.pattern.permute.xlu0 1
    %427 = vperm.xlu0 %426, %v29
    %v428 = vpop.permute.xlu0 %427
    %430 = vset.pattern.permute.xlu0 1
    %431 = vperm.xlu0 %430, %v30
    %v432 = vpop.permute.xlu0 %431
    %434 = vset.pattern.permute.xlu0 1
    %435 = vperm.xlu0 %434, %v31
    %v436 = vpop.permute.xlu0 %435
    %438 = vset.pattern.permute.xlu0 1
    %439 = vperm.xlu0 %438, %v32
    %v440 = vpop.permute.xlu0 %439
    %442 = vset.pattern.permute.xlu0 1
    %443 = vperm.xlu0 %442, %v33
    %v444 = vpop.permute.xlu0 %443
    %446 = vset.pattern.permute.xlu0 1
    %447 = vperm.xlu0 %446, %v34
    %v448 = vpop.permute.xlu0 %447
    %450 = vset.pattern.permute.xlu0 1
    %451 = vperm.xlu0 %450, %v35
    %v452 = vpop.permute.xlu0 %451
    %454 = vset.pattern.permute.xlu0 1
    %455 = vperm.xlu0 %454, %v36
    %v456 = vpop.permute.xlu0 %455
    %458 = vset.pattern.permute.xlu0 1
    %459 = vperm.xlu0 %458, %v37
    %v460 = vpop.permute.xlu0 %459
    %462 = vset.pattern.permute.xlu0 1
    %463 = vperm.xlu0 %462, %v38
    %v464 = vpop.permute.xlu0 %463
    %466 = vset.pattern.permute.xlu0 1
    %467 = vperm.xlu0 %466, %v39
    %v468 = vpop.permute.xlu0 %467
    %470 = vset.pattern.permute.xlu0 1
    %471 = vperm.xlu0 %470, %v40
    %v472 = vpop.permute.xlu0 %471
    %474 = vset.pattern.permute.xlu0 1
    %475 = vperm.xlu0 %474, %v41
    %v476 = vpop.permute.xlu0 %475
    %478 = vset.pattern.permute.xlu0 1
    %479 = vperm.xlu0 %478, %v42
    %v480 = vpop.permute.xlu0 %479
    %482 = vset.pattern.permute.xlu0 1
    %483 = vperm.xlu0 %482, %v43
    %v484 = vpop.permute.xlu0 %483
    %486 = vset.pattern.permute.xlu0 1
    %487 = vperm.xlu0 %486, %v44
    %v488 = vpop.permute.xlu0 %487
    %490 = vset.pattern.permute.xlu0 1
    %491 = vperm.xlu0 %490, %v45
    %v492 = vpop.permute.xlu0 %491
    %494 = vset.pattern.permute.xlu0 1
    %495 = vperm.xlu0 %494, %v46
    %v496 = vpop.permute.xlu0 %495
    %498 = vset.pattern.permute.xlu0 1
    %499 = vperm.xlu0 %498, %v47
    %v500 = vpop.permute.xlu0 %499
    %502 = vset.pattern.permute.xlu0 1
    %503 = vperm.xlu0 %502, %v48
    %v504 = vpop.permute.xlu0 %503
    %506 = vset.pattern.permute.xlu0 1
    %507 = vperm.xlu0 %506, %v49
    %v508 = vpop.permute.xlu0 %507
    %510 = vset.pattern.permute.xlu0 1
    %511 = vperm.xlu0 %510, %v50
    %v512 = vpop.permute.xlu0 %511
    %514 = vset.pattern.permute.xlu0 1
    %515 = vperm.xlu0 %514, %v51
    %v516 = vpop.permute.xlu0 %515
    %518 = vset.pattern.permute.xlu0 1
    %519 = vperm.xlu0 %518, %v52
    %v520 = vpop.permute.xlu0 %519
    %v522 = vperm.slane %v53, 1
    %v523 = vperm.slane %v53, 5
    %v524 = vperm.slane %v54, 1
    %v528 = vperm.slane %v522, 1
    %v529 = vperm.slane %v523, 1
    %v530 = vperm.slane %v524, 1
    %v531 = vmul.f32 %v372, %v528
    %v532 = vmul.f32 %v372, %v529
    %v533 = vmul.f32 %v372, %v530
    %v534 = vmul.f32 %v376, %v528
    %v535 = vmul.f32 %v376, %v529
    %v536 = vmul.f32 %v376, %v530
    %v537 = vmul.f32 %v380, %v528
    %v538 = vmul.f32 %v380, %v529
    %v539 = vmul.f32 %v380, %v530
    %v540 = vmul.f32 %v384, %v528
    %v541 = vmul.f32 %v384, %v529
    %v542 = vmul.f32 %v384, %v530
    %v543 = vmul.f32 %v388, %v528
    %v544 = vmul.f32 %v388, %v529
    %v545 = vmul.f32 %v388, %v530
    %v546 = vmul.f32 %v392, %v528
    %v547 = vmul.f32 %v392, %v529
    %v548 = vmul.f32 %v392, %v530
    %v549 = vmul.f32 %v396, %v528
    %v550 = vmul.f32 %v396, %v529
    %v551 = vmul.f32 %v396, %v530
    %v552 = vmul.f32 %v400, %v528
    %v553 = vmul.f32 %v400, %v529
    %v554 = vmul.f32 %v400, %v530
    %v555 = vmul.f32 %v404, %v528
    %v556 = vmul.f32 %v404, %v529
    %v557 = vmul.f32 %v404, %v530
    %v558 = vmul.f32 %v408, %v528
    %v559 = vmul.f32 %v408, %v529
    %v560 = vmul.f32 %v408, %v530
    %v561 = vmul.f32 %v412, %v528
    %v562 = vmul.f32 %v412, %v529
    %v563 = vmul.f32 %v412, %v530
    %v564 = vmul.f32 %v416, %v528
    %v565 = vmul.f32 %v416, %v529
    %v566 = vmul.f32 %v416, %v530
    %v567 = vmul.f32 %v420, %v528
    %v568 = vmul.f32 %v420, %v529
    %v569 = vmul.f32 %v420, %v530
    %v570 = vmul.f32 %v424, %v528
    %v571 = vmul.f32 %v424, %v529
    %v572 = vmul.f32 %v424, %v530
    %v573 = vmul.f32 %v428, %v528
    %v574 = vmul.f32 %v428, %v529
    %v575 = vmul.f32 %v428, %v530
    %v576 = vmul.f32 %v432, %v528
    %v577 = vmul.f32 %v432, %v529
    %v578 = vmul.f32 %v432, %v530
    %v579 = vmul.f32 %v436, %v528
    %v580 = vmul.f32 %v436, %v529
    %v581 = vmul.f32 %v436, %v530
    %v582 = vmul.f32 %v440, %v528
    %v583 = vmul.f32 %v440, %v529
    %v584 = vmul.f32 %v440, %v530
    %v585 = vmul.f32 %v444, %v528
    %v586 = vmul.f32 %v444, %v529
    %v587 = vmul.f32 %v444, %v530
    %v588 = vmul.f32 %v448, %v528
    %v589 = vmul.f32 %v448, %v529
    %v590 = vmul.f32 %v448, %v530
    %v591 = vmul.f32 %v452, %v528
    %v592 = vmul.f32 %v452, %v529
    %v593 = vmul.f32 %v452, %v530
    %v594 = vmul.f32 %v456, %v528
    %v595 = vmul.f32 %v456, %v529
    %v596 = vmul.f32 %v456, %v530
    %v597 = vmul.f32 %v460, %v528
    %v598 = vmul.f32 %v460, %v529
    %v599 = vmul.f32 %v460, %v530
    %v600 = vmul.f32 %v464, %v528
    %v601 = vmul.f32 %v464, %v529
    %v602 = vmul.f32 %v464, %v530
    %v603 = vmul.f32 %v468, %v528
    %v604 = vmul.f32 %v468, %v529
    %v605 = vmul.f32 %v468, %v530
    %v606 = vmul.f32 %v472, %v528
    %v607 = vmul.f32 %v472, %v529
    %v608 = vmul.f32 %v472, %v530
    %v609 = vmul.f32 %v476, %v528
    %v610 = vmul.f32 %v476, %v529
    %v611 = vmul.f32 %v476, %v530
    %v612 = vmul.f32 %v480, %v528
    %v613 = vmul.f32 %v480, %v529
    %v614 = vmul.f32 %v480, %v530
    %v615 = vmul.f32 %v484, %v528
    %v616 = vmul.f32 %v484, %v529
    %v617 = vmul.f32 %v484, %v530
    %v618 = vmul.f32 %v488, %v528
    %v619 = vmul.f32 %v488, %v529
    %v620 = vmul.f32 %v488, %v530
    %v621 = vmul.f32 %v492, %v528
    %v622 = vmul.f32 %v492, %v529
    %v623 = vmul.f32 %v492, %v530
    %v624 = vmul.f32 %v496, %v528
    %v625 = vmul.f32 %v496, %v529
    %v626 = vmul.f32 %v496, %v530
    %v627 = vmul.f32 %v500, %v528
    %v628 = vmul.f32 %v500, %v529
    %v629 = vmul.f32 %v500, %v530
    %v630 = vmul.f32 %v504, %v528
    %v631 = vmul.f32 %v504, %v529
    %v632 = vmul.f32 %v504, %v530
    %v633 = vmul.f32 %v508, %v528
    %v634 = vmul.f32 %v508, %v529
    %v635 = vmul.f32 %v508, %v530
    %v636 = vmul.f32 %v512, %v528
    %v637 = vmul.f32 %v512, %v529
    %v638 = vmul.f32 %v512, %v530
    %v639 = vmul.f32 %v516, %v528
    %v640 = vmul.f32 %v516, %v529
    %v641 = vmul.f32 %v516, %v530
    %v642 = vmul.f32 %v520, %v528
    %v643 = vmul.f32 %v520, %v529
    %v644 = vmul.f32 %v520, %v530
    %v645 = vadd.f32 %v256, %v531
    %v646 = vadd.f32 %v257, %v532
    %v647 = vadd.f32 %v258, %v533
    %v648 = vadd.f32 %v259, %v534
    %v649 = vadd.f32 %v260, %v535
    %v650 = vadd.f32 %v261, %v536
    %v651 = vadd.f32 %v262, %v537
    %v652 = vadd.f32 %v263, %v538
    %v653 = vadd.f32 %v264, %v539
    %v654 = vadd.f32 %v265, %v540
    %v655 = vadd.f32 %v266, %v541
    %v656 = vadd.f32 %v267, %v542
    %v657 = vadd.f32 %v268, %v543
    %v658 = vadd.f32 %v269, %v544
    %v659 = vadd.f32 %v270, %v545
    %v660 = vadd.f32 %v271, %v546
    %v661 = vadd.f32 %v272, %v547
    %v662 = vadd.f32 %v273, %v548
    %v663 = vadd.f32 %v274, %v549
    %v664 = vadd.f32 %v275, %v550
    %v665 = vadd.f32 %v276, %v551
    %v666 = vadd.f32 %v277, %v552
    %v667 = vadd.f32 %v278, %v553
    %v668 = vadd.f32 %v279, %v554
    %v669 = vadd.f32 %v280, %v555
    %v670 = vadd.f32 %v281, %v556
    %v671 = vadd.f32 %v282, %v557
    %v672 = vadd.f32 %v283, %v558
    %v673 = vadd.f32 %v284, %v559
    %v674 = vadd.f32 %v285, %v560
    %v675 = vadd.f32 %v286, %v561
    %v676 = vadd.f32 %v287, %v562
    %v677 = vadd.f32 %v288, %v563
    %v678 = vadd.f32 %v289, %v564
    %v679 = vadd.f32 %v290, %v565
    %v680 = vadd.f32 %v291, %v566
    %v681 = vadd.f32 %v292, %v567
    %v682 = vadd.f32 %v293, %v568
    %v683 = vadd.f32 %v294, %v569
    %v684 = vadd.f32 %v295, %v570
    %v685 = vadd.f32 %v296, %v571
    %v686 = vadd.f32 %v297, %v572
    %v687 = vadd.f32 %v298, %v573
    %v688 = vadd.f32 %v299, %v574
    %v689 = vadd.f32 %v300, %v575
    %v690 = vadd.f32 %v301, %v576
    %v691 = vadd.f32 %v302, %v577
    %v692 = vadd.f32 %v303, %v578
    %v693 = vadd.f32 %v304, %v579
    %v694 = vadd.f32 %v305, %v580
    %v695 = vadd.f32 %v306, %v581
    %v696 = vadd.f32 %v307, %v582
    %v697 = vadd.f32 %v308, %v583
    %v698 = vadd.f32 %v309, %v584
    %v699 = vadd.f32 %v310, %v585
    %v700 = vadd.f32 %v311, %v586
    %v701 = vadd.f32 %v312, %v587
    %v702 = vadd.f32 %v313, %v588
    %v703 = vadd.f32 %v314, %v589
    %v704 = vadd.f32 %v315, %v590
    %v705 = vadd.f32 %v316, %v591
    %v706 = vadd.f32 %v317, %v592
    %v707 = vadd.f32 %v318, %v593
    %v708 = vadd.f32 %v319, %v594
    %v709 = vadd.f32 %v320, %v595
    %v710 = vadd.f32 %v321, %v596
    %v711 = vadd.f32 %v322, %v597
    %v712 = vadd.f32 %v323, %v598
    %v713 = vadd.f32 %v324, %v599
    %v714 = vadd.f32 %v325, %v600
    %v715 = vadd.f32 %v326, %v601
    %v716 = vadd.f32 %v327, %v602
    %v717 = vadd.f32 %v328, %v603
    %v718 = vadd.f32 %v329, %v604
    %v719 = vadd.f32 %v330, %v605
    %v720 = vadd.f32 %v331, %v606
    %v721 = vadd.f32 %v332, %v607
    %v722 = vadd.f32 %v333, %v608
    %v723 = vadd.f32 %v334, %v609
    %v724 = vadd.f32 %v335, %v610
    %v725 = vadd.f32 %v336, %v611
    %v726 = vadd.f32 %v337, %v612
    %v727 = vadd.f32 %v338, %v613
    %v728 = vadd.f32 %v339, %v614
    %v729 = vadd.f32 %v340, %v615
    %v730 = vadd.f32 %v341, %v616
    %v731 = vadd.f32 %v342, %v617
    %v732 = vadd.f32 %v343, %v618
    %v733 = vadd.f32 %v344, %v619
    %v734 = vadd.f32 %v345, %v620
    %v735 = vadd.f32 %v346, %v621
    %v736 = vadd.f32 %v347, %v622
    %v737 = vadd.f32 %v348, %v623
    %v738 = vadd.f32 %v349, %v624
    %v739 = vadd.f32 %v350, %v625
    %v740 = vadd.f32 %v351, %v626
    %v741 = vadd.f32 %v352, %v627
    %v742 = vadd.f32 %v353, %v628
    %v743 = vadd.f32 %v354, %v629
    %v744 = vadd.f32 %v355, %v630
    %v745 = vadd.f32 %v356, %v631
    %v746 = vadd.f32 %v357, %v632
    %v747 = vadd.f32 %v358, %v633
    %v748 = vadd.f32 %v359, %v634
    %v749 = vadd.f32 %v360, %v635
    %v750 = vadd.f32 %v361, %v636
    %v751 = vadd.f32 %v362, %v637
    %v752 = vadd.f32 %v363, %v638
    %v753 = vadd.f32 %v364, %v639
    %v754 = vadd.f32 %v365, %v640
    %v755 = vadd.f32 %v366, %v641
    %v756 = vadd.f32 %v367, %v642
    %v757 = vadd.f32 %v368, %v643
    %v758 = vadd.f32 %v369, %v644
    %759 = vset.pattern.permute.xlu0 2
    %760 = vperm.xlu0 %759, %v15
    %v761 = vpop.permute.xlu0 %760
    %763 = vset.pattern.permute.xlu0 2
    %764 = vperm.xlu0 %763, %v16
    %v765 = vpop.permute.xlu0 %764
    %767 = vset.pattern.permute.xlu0 2
    %768 = vperm.xlu0 %767, %v17
    %v769 = vpop.permute.xlu0 %768
    %771 = vset.pattern.permute.xlu0 2
    %772 = vperm.xlu0 %771, %v18
    %v773 = vpop.permute.xlu0 %772
    %775 = vset.pattern.permute.xlu0 2
    %776 = vperm.xlu0 %775, %v19
    %v777 = vpop.permute.xlu0 %776
    %779 = vset.pattern.permute.xlu0 2
    %780 = vperm.xlu0 %779, %v20
    %v781 = vpop.permute.xlu0 %780
    %783 = vset.pattern.permute.xlu0 2
    %784 = vperm.xlu0 %783, %v21
    %v785 = vpop.permute.xlu0 %784
    %787 = vset.pattern.permute.xlu0 2
    %788 = vperm.xlu0 %787, %v22
    %v789 = vpop.permute.xlu0 %788
    %791 = vset.pattern.permute.xlu0 2
    %792 = vperm.xlu0 %791, %v23
    %v793 = vpop.permute.xlu0 %792
    %795 = vset.pattern.permute.xlu0 2
    %796 = vperm.xlu0 %795, %v24
    %v797 = vpop.permute.xlu0 %796
    %799 = vset.pattern.permute.xlu0 2
    %800 = vperm.xlu0 %799, %v25
    %v801 = vpop.permute.xlu0 %800
    %803 = vset.pattern.permute.xlu0 2
    %804 = vperm.xlu0 %803, %v26
    %v805 = vpop.permute.xlu0 %804
    %807 = vset.pattern.permute.xlu0 2
    %808 = vperm.xlu0 %807, %v27
    %v809 = vpop.permute.xlu0 %808
    %811 = vset.pattern.permute.xlu0 2
    %812 = vperm.xlu0 %811, %v28
    %v813 = vpop.permute.xlu0 %812
    %815 = vset.pattern.permute.xlu0 2
    %816 = vperm.xlu0 %815, %v29
    %v817 = vpop.permute.xlu0 %816
    %819 = vset.pattern.permute.xlu0 2
    %820 = vperm.xlu0 %819, %v30
    %v821 = vpop.permute.xlu0 %820
    %823 = vset.pattern.permute.xlu0 2
    %824 = vperm.xlu0 %823, %v31
    %v825 = vpop.permute.xlu0 %824
    %827 = vset.pattern.permute.xlu0 2
    %828 = vperm.xlu0 %827, %v32
    %v829 = vpop.permute.xlu0 %828
    %831 = vset.pattern.permute.xlu0 2
    %832 = vperm.xlu0 %831, %v33
    %v833 = vpop.permute.xlu0 %832
    %835 = vset.pattern.permute.xlu0 2
    %836 = vperm.xlu0 %835, %v34
    %v837 = vpop.permute.xlu0 %836
    %839 = vset.pattern.permute.xlu0 2
    %840 = vperm.xlu0 %839, %v35
    %v841 = vpop.permute.xlu0 %840
    %843 = vset.pattern.permute.xlu0 2
    %844 = vperm.xlu0 %843, %v36
    %v845 = vpop.permute.xlu0 %844
    %847 = vset.pattern.permute.xlu0 2
    %848 = vperm.xlu0 %847, %v37
    %v849 = vpop.permute.xlu0 %848
    %851 = vset.pattern.permute.xlu0 2
    %852 = vperm.xlu0 %851, %v38
    %v853 = vpop.permute.xlu0 %852
    %855 = vset.pattern.permute.xlu0 2
    %856 = vperm.xlu0 %855, %v39
    %v857 = vpop.permute.xlu0 %856
    %859 = vset.pattern.permute.xlu0 2
    %860 = vperm.xlu0 %859, %v40
    %v861 = vpop.permute.xlu0 %860
    %863 = vset.pattern.permute.xlu0 2
    %864 = vperm.xlu0 %863, %v41
    %v865 = vpop.permute.xlu0 %864
    %867 = vset.pattern.permute.xlu0 2
    %868 = vperm.xlu0 %867, %v42
    %v869 = vpop.permute.xlu0 %868
    %871 = vset.pattern.permute.xlu0 2
    %872 = vperm.xlu0 %871, %v43
    %v873 = vpop.permute.xlu0 %872
    %875 = vset.pattern.permute.xlu0 2
    %876 = vperm.xlu0 %875, %v44
    %v877 = vpop.permute.xlu0 %876
    %879 = vset.pattern.permute.xlu0 2
    %880 = vperm.xlu0 %879, %v45
    %v881 = vpop.permute.xlu0 %880
    %883 = vset.pattern.permute.xlu0 2
    %884 = vperm.xlu0 %883, %v46
    %v885 = vpop.permute.xlu0 %884
    %887 = vset.pattern.permute.xlu0 2
    %888 = vperm.xlu0 %887, %v47
    %v889 = vpop.permute.xlu0 %888
    %891 = vset.pattern.permute.xlu0 2
    %892 = vperm.xlu0 %891, %v48
    %v893 = vpop.permute.xlu0 %892
    %895 = vset.pattern.permute.xlu0 2
    %896 = vperm.xlu0 %895, %v49
    %v897 = vpop.permute.xlu0 %896
    %899 = vset.pattern.permute.xlu0 2
    %900 = vperm.xlu0 %899, %v50
    %v901 = vpop.permute.xlu0 %900
    %903 = vset.pattern.permute.xlu0 2
    %904 = vperm.xlu0 %903, %v51
    %v905 = vpop.permute.xlu0 %904
    %907 = vset.pattern.permute.xlu0 2
    %908 = vperm.xlu0 %907, %v52
    %v909 = vpop.permute.xlu0 %908
    %v911 = vperm.slane %v53, 2
    %v912 = vperm.slane %v53, 6
    %v913 = vperm.slane %v54, 2
    %v917 = vperm.slane %v911, 2
    %v918 = vperm.slane %v912, 2
    %v919 = vperm.slane %v913, 2
    %v920 = vmul.f32 %v761, %v917
    %v921 = vmul.f32 %v761, %v918
    %v922 = vmul.f32 %v761, %v919
    %v923 = vmul.f32 %v765, %v917
    %v924 = vmul.f32 %v765, %v918
    %v925 = vmul.f32 %v765, %v919
    %v926 = vmul.f32 %v769, %v917
    %v927 = vmul.f32 %v769, %v918
    %v928 = vmul.f32 %v769, %v919
    %v929 = vmul.f32 %v773, %v917
    %v930 = vmul.f32 %v773, %v918
    %v931 = vmul.f32 %v773, %v919
    %v932 = vmul.f32 %v777, %v917
    %v933 = vmul.f32 %v777, %v918
    %v934 = vmul.f32 %v777, %v919
    %v935 = vmul.f32 %v781, %v917
    %v936 = vmul.f32 %v781, %v918
    %v937 = vmul.f32 %v781, %v919
    %v938 = vmul.f32 %v785, %v917
    %v939 = vmul.f32 %v785, %v918
    %v940 = vmul.f32 %v785, %v919
    %v941 = vmul.f32 %v789, %v917
    %v942 = vmul.f32 %v789, %v918
    %v943 = vmul.f32 %v789, %v919
    %v944 = vmul.f32 %v793, %v917
    %v945 = vmul.f32 %v793, %v918
    %v946 = vmul.f32 %v793, %v919
    %v947 = vmul.f32 %v797, %v917
    %v948 = vmul.f32 %v797, %v918
    %v949 = vmul.f32 %v797, %v919
    %v950 = vmul.f32 %v801, %v917
    %v951 = vmul.f32 %v801, %v918
    %v952 = vmul.f32 %v801, %v919
    %v953 = vmul.f32 %v805, %v917
    %v954 = vmul.f32 %v805, %v918
    %v955 = vmul.f32 %v805, %v919
    %v956 = vmul.f32 %v809, %v917
    %v957 = vmul.f32 %v809, %v918
    %v958 = vmul.f32 %v809, %v919
    %v959 = vmul.f32 %v813, %v917
    %v960 = vmul.f32 %v813, %v918
    %v961 = vmul.f32 %v813, %v919
    %v962 = vmul.f32 %v817, %v917
    %v963 = vmul.f32 %v817, %v918
    %v964 = vmul.f32 %v817, %v919
    %v965 = vmul.f32 %v821, %v917
    %v966 = vmul.f32 %v821, %v918
    %v967 = vmul.f32 %v821, %v919
    %v968 = vmul.f32 %v825, %v917
    %v969 = vmul.f32 %v825, %v918
    %v970 = vmul.f32 %v825, %v919
    %v971 = vmul.f32 %v829, %v917
    %v972 = vmul.f32 %v829, %v918
    %v973 = vmul.f32 %v829, %v919
    %v974 = vmul.f32 %v833, %v917
    %v975 = vmul.f32 %v833, %v918
    %v976 = vmul.f32 %v833, %v919
    %v977 = vmul.f32 %v837, %v917
    %v978 = vmul.f32 %v837, %v918
    %v979 = vmul.f32 %v837, %v919
    %v980 = vmul.f32 %v841, %v917
    %v981 = vmul.f32 %v841, %v918
    %v982 = vmul.f32 %v841, %v919
    %v983 = vmul.f32 %v845, %v917
    %v984 = vmul.f32 %v845, %v918
    %v985 = vmul.f32 %v845, %v919
    %v986 = vmul.f32 %v849, %v917
    %v987 = vmul.f32 %v849, %v918
    %v988 = vmul.f32 %v849, %v919
    %v989 = vmul.f32 %v853, %v917
    %v990 = vmul.f32 %v853, %v918
    %v991 = vmul.f32 %v853, %v919
    %v992 = vmul.f32 %v857, %v917
    %v993 = vmul.f32 %v857, %v918
    %v994 = vmul.f32 %v857, %v919
    %v995 = vmul.f32 %v861, %v917
    %v996 = vmul.f32 %v861, %v918
    %v997 = vmul.f32 %v861, %v919
    %v998 = vmul.f32 %v865, %v917
    %v999 = vmul.f32 %v865, %v918
    %v1000 = vmul.f32 %v865, %v919
    %v1001 = vmul.f32 %v869, %v917
    %v1002 = vmul.f32 %v869, %v918
    %v1003 = vmul.f32 %v869, %v919
    %v1004 = vmul.f32 %v873, %v917
    %v1005 = vmul.f32 %v873, %v918
    %v1006 = vmul.f32 %v873, %v919
    %v1007 = vmul.f32 %v877, %v917
    %v1008 = vmul.f32 %v877, %v918
    %v1009 = vmul.f32 %v877, %v919
    %v1010 = vmul.f32 %v881, %v917
    %v1011 = vmul.f32 %v881, %v918
    %v1012 = vmul.f32 %v881, %v919
    %v1013 = vmul.f32 %v885, %v917
    %v1014 = vmul.f32 %v885, %v918
    %v1015 = vmul.f32 %v885, %v919
    %v1016 = vmul.f32 %v889, %v917
    %v1017 = vmul.f32 %v889, %v918
    %v1018 = vmul.f32 %v889, %v919
    %v1019 = vmul.f32 %v893, %v917
    %v1020 = vmul.f32 %v893, %v918
    %v1021 = vmul.f32 %v893, %v919
    %v1022 = vmul.f32 %v897, %v917
    %v1023 = vmul.f32 %v897, %v918
    %v1024 = vmul.f32 %v897, %v919
    %v1025 = vmul.f32 %v901, %v917
    %v1026 = vmul.f32 %v901, %v918
    %v1027 = vmul.f32 %v901, %v919
    %v1028 = vmul.f32 %v905, %v917
    %v1029 = vmul.f32 %v905, %v918
    %v1030 = vmul.f32 %v905, %v919
    %v1031 = vmul.f32 %v909, %v917
    %v1032 = vmul.f32 %v909, %v918
    %v1033 = vmul.f32 %v909, %v919
    %v1034 = vadd.f32 %v645, %v920
    %v1035 = vadd.f32 %v646, %v921
    %v1036 = vadd.f32 %v647, %v922
    %v1037 = vadd.f32 %v648, %v923
    %v1038 = vadd.f32 %v649, %v924
    %v1039 = vadd.f32 %v650, %v925
    %v1040 = vadd.f32 %v651, %v926
    %v1041 = vadd.f32 %v652, %v927
    %v1042 = vadd.f32 %v653, %v928
    %v1043 = vadd.f32 %v654, %v929
    %v1044 = vadd.f32 %v655, %v930
    %v1045 = vadd.f32 %v656, %v931
    %v1046 = vadd.f32 %v657, %v932
    %v1047 = vadd.f32 %v658, %v933
    %v1048 = vadd.f32 %v659, %v934
    %v1049 = vadd.f32 %v660, %v935
    %v1050 = vadd.f32 %v661, %v936
    %v1051 = vadd.f32 %v662, %v937
    %v1052 = vadd.f32 %v663, %v938
    %v1053 = vadd.f32 %v664, %v939
    %v1054 = vadd.f32 %v665, %v940
    %v1055 = vadd.f32 %v666, %v941
    %v1056 = vadd.f32 %v667, %v942
    %v1057 = vadd.f32 %v668, %v943
    %v1058 = vadd.f32 %v669, %v944
    %v1059 = vadd.f32 %v670, %v945
    %v1060 = vadd.f32 %v671, %v946
    %v1061 = vadd.f32 %v672, %v947
    %v1062 = vadd.f32 %v673, %v948
    %v1063 = vadd.f32 %v674, %v949
    %v1064 = vadd.f32 %v675, %v950
    %v1065 = vadd.f32 %v676, %v951
    %v1066 = vadd.f32 %v677, %v952
    %v1067 = vadd.f32 %v678, %v953
    %v1068 = vadd.f32 %v679, %v954
    %v1069 = vadd.f32 %v680, %v955
    %v1070 = vadd.f32 %v681, %v956
    %v1071 = vadd.f32 %v682, %v957
    %v1072 = vadd.f32 %v683, %v958
    %v1073 = vadd.f32 %v684, %v959
    %v1074 = vadd.f32 %v685, %v960
    %v1075 = vadd.f32 %v686, %v961
    %v1076 = vadd.f32 %v687, %v962
    %v1077 = vadd.f32 %v688, %v963
    %v1078 = vadd.f32 %v689, %v964
    %v1079 = vadd.f32 %v690, %v965
    %v1080 = vadd.f32 %v691, %v966
    %v1081 = vadd.f32 %v692, %v967
    %v1082 = vadd.f32 %v693, %v968
    %v1083 = vadd.f32 %v694, %v969
    %v1084 = vadd.f32 %v695, %v970
    %v1085 = vadd.f32 %v696, %v971
    %v1086 = vadd.f32 %v697, %v972
    %v1087 = vadd.f32 %v698, %v973
    %v1088 = vadd.f32 %v699, %v974
    %v1089 = vadd.f32 %v700, %v975
    %v1090 = vadd.f32 %v701, %v976
    %v1091 = vadd.f32 %v702, %v977
    %v1092 = vadd.f32 %v703, %v978
    %v1093 = vadd.f32 %v704, %v979
    %v1094 = vadd.f32 %v705, %v980
    %v1095 = vadd.f32 %v706, %v981
    %v1096 = vadd.f32 %v707, %v982
    %v1097 = vadd.f32 %v708, %v983
    %v1098 = vadd.f32 %v709, %v984
    %v1099 = vadd.f32 %v710, %v985
    %v1100 = vadd.f32 %v711, %v986
    %v1101 = vadd.f32 %v712, %v987
    %v1102 = vadd.f32 %v713, %v988
    %v1103 = vadd.f32 %v714, %v989
    %v1104 = vadd.f32 %v715, %v990
    %v1105 = vadd.f32 %v716, %v991
    %v1106 = vadd.f32 %v717, %v992
    %v1107 = vadd.f32 %v718, %v993
    %v1108 = vadd.f32 %v719, %v994
    %v1109 = vadd.f32 %v720, %v995
    %v1110 = vadd.f32 %v721, %v996
    %v1111 = vadd.f32 %v722, %v997
    %v1112 = vadd.f32 %v723, %v998
    %v1113 = vadd.f32 %v724, %v999
    %v1114 = vadd.f32 %v725, %v1000
    %v1115 = vadd.f32 %v726, %v1001
    %v1116 = vadd.f32 %v727, %v1002
    %v1117 = vadd.f32 %v728, %v1003
    %v1118 = vadd.f32 %v729, %v1004
    %v1119 = vadd.f32 %v730, %v1005
    %v1120 = vadd.f32 %v731, %v1006
    %v1121 = vadd.f32 %v732, %v1007
    %v1122 = vadd.f32 %v733, %v1008
    %v1123 = vadd.f32 %v734, %v1009
    %v1124 = vadd.f32 %v735, %v1010
    %v1125 = vadd.f32 %v736, %v1011
    %v1126 = vadd.f32 %v737, %v1012
    %v1127 = vadd.f32 %v738, %v1013
    %v1128 = vadd.f32 %v739, %v1014
    %v1129 = vadd.f32 %v740, %v1015
    %v1130 = vadd.f32 %v741, %v1016
    %v1131 = vadd.f32 %v742, %v1017
    %v1132 = vadd.f32 %v743, %v1018
    %v1133 = vadd.f32 %v744, %v1019
    %v1134 = vadd.f32 %v745, %v1020
    %v1135 = vadd.f32 %v746, %v1021
    %v1136 = vadd.f32 %v747, %v1022
    %v1137 = vadd.f32 %v748, %v1023
    %v1138 = vadd.f32 %v749, %v1024
    %v1139 = vadd.f32 %v750, %v1025
    %v1140 = vadd.f32 %v751, %v1026
    %v1141 = vadd.f32 %v752, %v1027
    %v1142 = vadd.f32 %v753, %v1028
    %v1143 = vadd.f32 %v754, %v1029
    %v1144 = vadd.f32 %v755, %v1030
    %v1145 = vadd.f32 %v756, %v1031
    %v1146 = vadd.f32 %v757, %v1032
    %v1147 = vadd.f32 %v758, %v1033
    %v1148 = vld [vmem:[%s2] sm:$0x7]
    %v1150 = vperm.slane %v1148, 0
    %v1151 = vperm.slane %v1148, 1
    %v1152 = vperm.slane %v1148, 2
    %v1156 = vadd.f32 %v1034, %v1150
    %v1157 = vadd.f32 %v1035, %v1151
    %v1158 = vadd.f32 %v1036, %v1152
    %v1159 = vadd.f32 %v1037, %v1150
    %v1160 = vadd.f32 %v1038, %v1151
    %v1161 = vadd.f32 %v1039, %v1152
    %v1162 = vadd.f32 %v1040, %v1150
    %v1163 = vadd.f32 %v1041, %v1151
    %v1164 = vadd.f32 %v1042, %v1152
    %v1165 = vadd.f32 %v1043, %v1150
    %v1166 = vadd.f32 %v1044, %v1151
    %v1167 = vadd.f32 %v1045, %v1152
    %v1168 = vadd.f32 %v1046, %v1150
    %v1169 = vadd.f32 %v1047, %v1151
    %v1170 = vadd.f32 %v1048, %v1152
    %v1171 = vadd.f32 %v1049, %v1150
    %v1172 = vadd.f32 %v1050, %v1151
    %v1173 = vadd.f32 %v1051, %v1152
    %v1174 = vadd.f32 %v1052, %v1150
    %v1175 = vadd.f32 %v1053, %v1151
    %v1176 = vadd.f32 %v1054, %v1152
    %v1177 = vadd.f32 %v1055, %v1150
    %v1178 = vadd.f32 %v1056, %v1151
    %v1179 = vadd.f32 %v1057, %v1152
    %v1180 = vadd.f32 %v1058, %v1150
    %v1181 = vadd.f32 %v1059, %v1151
    %v1182 = vadd.f32 %v1060, %v1152
    %v1183 = vadd.f32 %v1061, %v1150
    %v1184 = vadd.f32 %v1062, %v1151
    %v1185 = vadd.f32 %v1063, %v1152
    %v1186 = vadd.f32 %v1064, %v1150
    %v1187 = vadd.f32 %v1065, %v1151
    %v1188 = vadd.f32 %v1066, %v1152
    %v1189 = vadd.f32 %v1067, %v1150
    %v1190 = vadd.f32 %v1068, %v1151
    %v1191 = vadd.f32 %v1069, %v1152
    %v1192 = vadd.f32 %v1070, %v1150
    %v1193 = vadd.f32 %v1071, %v1151
    %v1194 = vadd.f32 %v1072, %v1152
    %v1195 = vadd.f32 %v1073, %v1150
    %v1196 = vadd.f32 %v1074, %v1151
    %v1197 = vadd.f32 %v1075, %v1152
    %v1198 = vadd.f32 %v1076, %v1150
    %v1199 = vadd.f32 %v1077, %v1151
    %v1200 = vadd.f32 %v1078, %v1152
    %v1201 = vadd.f32 %v1079, %v1150
    %v1202 = vadd.f32 %v1080, %v1151
    %v1203 = vadd.f32 %v1081, %v1152
    %v1204 = vadd.f32 %v1082, %v1150
    %v1205 = vadd.f32 %v1083, %v1151
    %v1206 = vadd.f32 %v1084, %v1152
    %v1207 = vadd.f32 %v1085, %v1150
    %v1208 = vadd.f32 %v1086, %v1151
    %v1209 = vadd.f32 %v1087, %v1152
    %v1210 = vadd.f32 %v1088, %v1150
    %v1211 = vadd.f32 %v1089, %v1151
    %v1212 = vadd.f32 %v1090, %v1152
    %v1213 = vadd.f32 %v1091, %v1150
    %v1214 = vadd.f32 %v1092, %v1151
    %v1215 = vadd.f32 %v1093, %v1152
    %v1216 = vadd.f32 %v1094, %v1150
    %v1217 = vadd.f32 %v1095, %v1151
    %v1218 = vadd.f32 %v1096, %v1152
    %v1219 = vadd.f32 %v1097, %v1150
    %v1220 = vadd.f32 %v1098, %v1151
    %v1221 = vadd.f32 %v1099, %v1152
    %v1222 = vadd.f32 %v1100, %v1150
    %v1223 = vadd.f32 %v1101, %v1151
    %v1224 = vadd.f32 %v1102, %v1152
    %v1225 = vadd.f32 %v1103, %v1150
    %v1226 = vadd.f32 %v1104, %v1151
    %v1227 = vadd.f32 %v1105, %v1152
    %v1228 = vadd.f32 %v1106, %v1150
    %v1229 = vadd.f32 %v1107, %v1151
    %v1230 = vadd.f32 %v1108, %v1152
    %v1231 = vadd.f32 %v1109, %v1150
    %v1232 = vadd.f32 %v1110, %v1151
    %v1233 = vadd.f32 %v1111, %v1152
    %v1234 = vadd.f32 %v1112, %v1150
    %v1235 = vadd.f32 %v1113, %v1151
    %v1236 = vadd.f32 %v1114, %v1152
    %v1237 = vadd.f32 %v1115, %v1150
    %v1238 = vadd.f32 %v1116, %v1151
    %v1239 = vadd.f32 %v1117, %v1152
    %v1240 = vadd.f32 %v1118, %v1150
    %v1241 = vadd.f32 %v1119, %v1151
    %v1242 = vadd.f32 %v1120, %v1152
    %v1243 = vadd.f32 %v1121, %v1150
    %v1244 = vadd.f32 %v1122, %v1151
    %v1245 = vadd.f32 %v1123, %v1152
    %v1246 = vadd.f32 %v1124, %v1150
    %v1247 = vadd.f32 %v1125, %v1151
    %v1248 = vadd.f32 %v1126, %v1152
    %v1249 = vadd.f32 %v1127, %v1150
    %v1250 = vadd.f32 %v1128, %v1151
    %v1251 = vadd.f32 %v1129, %v1152
    %v1252 = vadd.f32 %v1130, %v1150
    %v1253 = vadd.f32 %v1131, %v1151
    %v1254 = vadd.f32 %v1132, %v1152
    %v1255 = vadd.f32 %v1133, %v1150
    %v1256 = vadd.f32 %v1134, %v1151
    %v1257 = vadd.f32 %v1135, %v1152
    %v1258 = vadd.f32 %v1136, %v1150
    %v1259 = vadd.f32 %v1137, %v1151
    %v1260 = vadd.f32 %v1138, %v1152
    %v1261 = vadd.f32 %v1139, %v1150
    %v1262 = vadd.f32 %v1140, %v1151
    %v1263 = vadd.f32 %v1141, %v1152
    %v1264 = vadd.f32 %v1142, %v1150
    %v1265 = vadd.f32 %v1143, %v1151
    %v1266 = vadd.f32 %v1144, %v1152
    %v1267 = vadd.f32 %v1145, %v1150
    %v1268 = vadd.f32 %v1146, %v1151
    %v1269 = vadd.f32 %v1147, %v1152
    %1270 = vst [vmem:[#allocation2] sm:$0xff] %v1156
    %1271 = vst [vmem:[#allocation2 + $0x8] sm:$0xff] %v1157
    %1272 = vst [vmem:[#allocation2 + $0x10] sm:$0xff] %v1158
    %1273 = vst [vmem:[#allocation2 + $0x18] sm:$0xff] %v1159
    %1274 = vst [vmem:[#allocation2 + $0x20] sm:$0xff] %v1160
    %1275 = vst [vmem:[#allocation2 + $0x28] sm:$0xff] %v1161
    %1276 = vst [vmem:[#allocation2 + $0x30] sm:$0xff] %v1162
    %1277 = vst [vmem:[#allocation2 + $0x38] sm:$0xff] %v1163
    %1278 = vst [vmem:[#allocation2 + $0x40] sm:$0xff] %v1164
    %1279 = vst [vmem:[#allocation2 + $0x48] sm:$0xff] %v1165
    %1280 = vst [vmem:[#allocation2 + $0x50] sm:$0xff] %v1166
    %1281 = vst [vmem:[#allocation2 + $0x58] sm:$0xff] %v1167
    %1282 = vst [vmem:[#allocation2 + $0x60] sm:$0xff] %v1168
    %1283 = vst [vmem:[#allocation2 + $0x68] sm:$0xff] %v1169
    %1284 = vst [vmem:[#allocation2 + $0x70] sm:$0xff] %v1170
    %1285 = vst [vmem:[#allocation2 + $0x78] sm:$0xff] %v1171
    %1286 = vst [vmem:[#allocation2 + $0x80] sm:$0xff] %v1172
    %1287 = vst [vmem:[#allocation2 + $0x88] sm:$0xff] %v1173
    %1288 = vst [vmem:[#allocation2 + $0x90] sm:$0xff] %v1174
    %1289 = vst [vmem:[#allocation2 + $0x98] sm:$0xff] %v1175
    %1290 = vst [vmem:[#allocation2 + $0xa0] sm:$0xff] %v1176
    %1291 = vst [vmem:[#allocation2 + $0xa8] sm:$0xff] %v1177
    %1292 = vst [vmem:[#allocation2 + $0xb0] sm:$0xff] %v1178
    %1293 = vst [vmem:[#allocation2 + $0xb8] sm:$0xff] %v1179
    %1294 = vst [vmem:[#allocation2 + $0xc0] sm:$0xff] %v1180
    %1295 = vst [vmem:[#allocation2 + $0xc8] sm:$0xff] %v1181
    %1296 = vst [vmem:[#allocation2 + $0xd0] sm:$0xff] %v1182
    %1297 = vst [vmem:[#allocation2 + $0xd8] sm:$0xff] %v1183
    %1298 = vst [vmem:[#allocation2 + $0xe0] sm:$0xff] %v1184
    %1299 = vst [vmem:[#allocation2 + $0xe8] sm:$0xff] %v1185
    %1300 = vst [vmem:[#allocation2 + $0xf0] sm:$0xff] %v1186
    %1301 = vst [vmem:[#allocation2 + $0xf8] sm:$0xff] %v1187
    %1302 = vst [vmem:[#allocation2 + $0x100] sm:$0xff] %v1188
    %1303 = vst [vmem:[#allocation2 + $0x108] sm:$0xff] %v1189
    %1304 = vst [vmem:[#allocation2 + $0x110] sm:$0xff] %v1190
    %1305 = vst [vmem:[#allocation2 + $0x118] sm:$0xff] %v1191
    %1306 = vst [vmem:[#allocation2 + $0x120] sm:$0xff] %v1192
    %1307 = vst [vmem:[#allocation2 + $0x128] sm:$0xff] %v1193
    %1308 = vst [vmem:[#allocation2 + $0x130] sm:$0xff] %v1194
    %1309 = vst [vmem:[#allocation2 + $0x138] sm:$0xff] %v1195
    %1310 = vst [vmem:[#allocation2 + $0x140] sm:$0xff] %v1196
    %1311 = vst [vmem:[#allocation2 + $0x148] sm:$0xff] %v1197
    %1312 = vst [vmem:[#allocation2 + $0x150] sm:$0xff] %v1198
    %1313 = vst [vmem:[#allocation2 + $0x158] sm:$0xff] %v1199
    %1314 = vst [vmem:[#allocation2 + $0x160] sm:$0xff] %v1200
    %1315 = vst [vmem:[#allocation2 + $0x168] sm:$0xff] %v1201
    %1316 = vst [vmem:[#allocation2 + $0x170] sm:$0xff] %v1202
    %1317 = vst [vmem:[#allocation2 + $0x178] sm:$0xff] %v1203
    %1318 = vst [vmem:[#allocation2 + $0x180] sm:$0xff] %v1204
    %1319 = vst [vmem:[#allocation2 + $0x188] sm:$0xff] %v1205
    %1320 = vst [vmem:[#allocation2 + $0x190] sm:$0xff] %v1206
    %1321 = vst [vmem:[#allocation2 + $0x198] sm:$0xff] %v1207
    %1322 = vst [vmem:[#allocation2 + $0x1a0] sm:$0xff] %v1208
    %1323 = vst [vmem:[#allocation2 + $0x1a8] sm:$0xff] %v1209
    %1324 = vst [vmem:[#allocation2 + $0x1b0] sm:$0xff] %v1210
    %1325 = vst [vmem:[#allocation2 + $0x1b8] sm:$0xff] %v1211
    %1326 = vst [vmem:[#allocation2 + $0x1c0] sm:$0xff] %v1212
    %1327 = vst [vmem:[#allocation2 + $0x1c8] sm:$0xff] %v1213
    %1328 = vst [vmem:[#allocation2 + $0x1d0] sm:$0xff] %v1214
    %1329 = vst [vmem:[#allocation2 + $0x1d8] sm:$0xff] %v1215
    %1330 = vst [vmem:[#allocation2 + $0x1e0] sm:$0xff] %v1216
    %1331 = vst [vmem:[#allocation2 + $0x1e8] sm:$0xff] %v1217
    %1332 = vst [vmem:[#allocation2 + $0x1f0] sm:$0xff] %v1218
    %1333 = vst [vmem:[#allocation2 + $0x1f8] sm:$0xff] %v1219
    %1334 = vst [vmem:[#allocation2 + $0x200] sm:$0xff] %v1220
    %1335 = vst [vmem:[#allocation2 + $0x208] sm:$0xff] %v1221
    %1336 = vst [vmem:[#allocation2 + $0x210] sm:$0xff] %v1222
    %1337 = vst [vmem:[#allocation2 + $0x218] sm:$0xff] %v1223
    %1338 = vst [vmem:[#allocation2 + $0x220] sm:$0xff] %v1224
    %1339 = vst [vmem:[#allocation2 + $0x228] sm:$0xff] %v1225
    %1340 = vst [vmem:[#allocation2 + $0x230] sm:$0xff] %v1226
    %1341 = vst [vmem:[#allocation2 + $0x238] sm:$0xff] %v1227
    %1342 = vst [vmem:[#allocation2 + $0x240] sm:$0xff] %v1228
    %1343 = vst [vmem:[#allocation2 + $0x248] sm:$0xff] %v1229
    %1344 = vst [vmem:[#allocation2 + $0x250] sm:$0xff] %v1230
    %1345 = vst [vmem:[#allocation2 + $0x258] sm:$0xff] %v1231
    %1346 = vst [vmem:[#allocation2 + $0x260] sm:$0xff] %v1232
    %1347 = vst [vmem:[#allocation2 + $0x268] sm:$0xff] %v1233
    %1348 = vst [vmem:[#allocation2 + $0x270] sm:$0xff] %v1234
    %1349 = vst [vmem:[#allocation2 + $0x278] sm:$0xff] %v1235
    %1350 = vst [vmem:[#allocation2 + $0x280] sm:$0xff] %v1236
    %1351 = vst [vmem:[#allocation2 + $0x288] sm:$0xff] %v1237
    %1352 = vst [vmem:[#allocation2 + $0x290] sm:$0xff] %v1238
    %1353 = vst [vmem:[#allocation2 + $0x298] sm:$0xff] %v1239
    %1354 = vst [vmem:[#allocation2 + $0x2a0] sm:$0xff] %v1240
    %1355 = vst [vmem:[#allocation2 + $0x2a8] sm:$0xff] %v1241
    %1356 = vst [vmem:[#allocation2 + $0x2b0] sm:$0xff] %v1242
    %1357 = vst [vmem:[#allocation2 + $0x2b8] sm:$0xff] %v1243
    %1358 = vst [vmem:[#allocation2 + $0x2c0] sm:$0xff] %v1244
    %1359 = vst [vmem:[#allocation2 + $0x2c8] sm:$0xff] %v1245
    %1360 = vst [vmem:[#allocation2 + $0x2d0] sm:$0xff] %v1246
    %1361 = vst [vmem:[#allocation2 + $0x2d8] sm:$0xff] %v1247
    %1362 = vst [vmem:[#allocation2 + $0x2e0] sm:$0xff] %v1248
    %1363 = vst [vmem:[#allocation2 + $0x2e8] sm:$0xff] %v1249
    %1364 = vst [vmem:[#allocation2 + $0x2f0] sm:$0xff] %v1250
    %1365 = vst [vmem:[#allocation2 + $0x2f8] sm:$0xff] %v1251
    %1366 = vst [vmem:[#allocation2 + $0x300] sm:$0xff] %v1252
    %1367 = vst [vmem:[#allocation2 + $0x308] sm:$0xff] %v1253
    %1368 = vst [vmem:[#allocation2 + $0x310] sm:$0xff] %v1254
    %1369 = vst [vmem:[#allocation2 + $0x318] sm:$0xff] %v1255
    %1370 = vst [vmem:[#allocation2 + $0x320] sm:$0xff] %v1256
    %1371 = vst [vmem:[#allocation2 + $0x328] sm:$0xff] %v1257
    %1372 = vst [vmem:[#allocation2 + $0x330] sm:$0xff] %v1258
    %1373 = vst [vmem:[#allocation2 + $0x338] sm:$0xff] %v1259
    %1374 = vst [vmem:[#allocation2 + $0x340] sm:$0xff] %v1260
    %1375 = vst [vmem:[#allocation2 + $0x348] sm:$0xff] %v1261
    %1376 = vst [vmem:[#allocation2 + $0x350] sm:$0xff] %v1262
    %1377 = vst [vmem:[#allocation2 + $0x358] sm:$0xff] %v1263
    %1378 = vst [vmem:[#allocation2 + $0x360] sm:$0xff] %v1264
    %1379 = vst [vmem:[#allocation2 + $0x368] sm:$0xff] %v1265
    %1380 = vst [vmem:[#allocation2 + $0x370] sm:$0xff] %v1266
    %1381 = vst [vmem:[#allocation2 + $0x378] sm:$0xff] %v1267
    %1382 = vst [vmem:[#allocation2 + $0x380] sm:$0xff] %v1268
    %1383 = vst [vmem:[#allocation2 + $0x388] sm:$0xff] %v1269
    // Predicated region
    $region14: #{tpu_custom_call.1} parent=1 // pred_check
      _
    $region15: #{tpu_custom_call.1} parent=1 // pred_check_branch
      %1385 = sbr.rel (0) target = $region17
    $region16: #{tpu_custom_call.1} parent=1 // pred_region
      %1387 = vsyncadd [#allocation3], 0
      %s1388 = sshll.u32 [#allocation2], 4
      %s1389 = int_to_ptr.vmem [resolvable:$true] %s1388
      %s1390 = sshll.u32 %s3, 4
      %s1391 = int_to_ptr.hbm [resolvable:$true] %s1390
      %1396 = dma.vmem_to_hbm [thread:$0]  %s1389, 14592, %s1391, [#allocation3], 384, 384, 24
    $region17: #{tpu_custom_call.1} parent=1 // pred_fallthru
      _
    // Predicated region
    $region18: #{tpu_custom_call.1} parent=1 // pred_check
      _
    $region19: #{tpu_custom_call.1} parent=1 // pred_check_branch
      %1398 = sbr.rel (0) target = $region21
    $region20: #{tpu_custom_call.1} parent=1 // pred_region
      %1400 = dma.done [#allocation3], 14592
    $region21: #{tpu_custom_call.1} parent=1 // pred_fallthru
      _
    %1401 = vsyncpa [#allocation3], 1

</llo_original>
